<compile_context>
chip_gen: v5e
topology: v5e:2x2
jax: 0.10.0
libtpu: 0.0.40
codegen_flags: <defaults>
</compile_context>

<pallas_src>
import functools
from typing import NamedTuple

import jax
import jax.numpy as jnp
from jax import lax
from jax.experimental import pallas as pl
from jax.experimental.pallas import tpu as pltpu


def _round_up(x, m):
    return (x + m - 1) // m * m


class FusedSpec(NamedTuple):
    """Static layout metadata for the fused (lane-padded) operands."""
    input_size: int
    hidden: int
    n_components: int
    n_classes: int
    h2: int          # fused hidden width (lane padded):  [pi-hidden | normal-hidden | pad]
    out: int         # fused output width (lane padded)
    mean_start: int  # first mean column in the output slab
    sd_start: int    # first sd column in the output slab
    split_l2: bool   # layer 2 runs as two half-K dots (hidden % 128 == 0)


@functools.lru_cache(maxsize=None)
def _vmem_limit_bytes():
    # ~75% of physical VMEM: <=48 MiB on v7x (64 MiB), ~96 MiB on v5e/v6e (128 MiB).
    try:
        cap = int(pltpu.get_tpu_info().vmem_capacity_bytes)
    except Exception:
        cap = 64 * 1024 * 1024
    return int(max(32 * 1024 * 1024, min(cap * 3 // 4, 100 * 1024 * 1024)))


def _batch_tiling(batch):
    """Pick (tile, padded_batch). Aim for <=512-row tiles and an even grid so
    both v7x TensorCores get work; v5e/v6e (1 TC) are unaffected."""
    n = max(1, pl.cdiv(batch, 512))
    if n > 1 and n % 2 == 1:
        n += 1
    tb = _round_up(pl.cdiv(batch, n), 8)
    bp = _round_up(batch, tb)
    if bp // tb == 1 and tb >= 128:
        tb = _round_up(pl.cdiv(bp, 2), 8)
        bp = _round_up(batch, tb)
    return tb, bp


# ----------------------------- kernels ---------------------------------------


def _elu(v):
    # ELU(alpha=1). exp only sees the clamped (<=0) branch -> no overflow in the
    # discarded lane.
    return jnp.where(v > 0, v, jnp.exp(jnp.minimum(v, 0.0)) - 1.0)


def _mdn_kernel_blockdiag(x_ref, w1_ref, b1_ref, w2_ref, b2_ref, out_ref, *, sd_start):
    # Fused layer 1: [h | g | pad] = ELU(x @ [W1p | W1n | 0] + [b1p | b1n | 0])
    x = x_ref[...]
    hg = jnp.dot(x, w1_ref[...], preferred_element_type=jnp.float32) + b1_ref[...]
    hg = _elu(hg)
    # Fused layer 2 (block-diagonal W2): lane-dense slab
    #   columns = [pi_logits | mean | log_sd | zero-pad].
    z = jnp.dot(hg, w2_ref[...], preferred_element_type=jnp.float32) + b2_ref[...]
    # Fused sd exponential: columns >= sd_start are the raw log-sd lanes; the
    # other branch's values are selected away (no NaN propagation).
    col = lax.broadcasted_iota(jnp.int32, z.shape, 1)
    out_ref[...] = jnp.where(col >= sd_start, jnp.exp(z), z)


def _mdn_kernel_split(x_ref, w1_ref, b1_ref, w2a_ref, w2b_ref, b2_ref, out_ref,
                      *, hidden, out_p, kc):
    # Fused layer 1 as above; hidden % 128 == 0 so both halves are lane-aligned.
    x = x_ref[...]
    hg = jnp.dot(x, w1_ref[...], preferred_element_type=jnp.float32) + b1_ref[...]
    hg = _elu(hg)
    b2 = b2_ref[...]
    # Layer 2 split into two dots with K = hidden each (vs K = 2*hidden for the
    # block-diagonal form) -> halves the layer-2 MXU passes.
    o1 = jnp.dot(hg[:, :hidden], w2a_ref[...], preferred_element_type=jnp.float32) + b2[:, :out_p]
    o2 = jnp.dot(hg[:, hidden:], w2b_ref[...], preferred_element_type=jnp.float32) + b2[:, out_p:]
    # Fused sd exponential on the normal block (columns >= kc are raw log-sd).
    col = lax.broadcasted_iota(jnp.int32, o2.shape, 1)
    o2 = jnp.where(col >= kc, jnp.exp(o2), o2)
    out_ref[:, :out_p] = o1
    out_ref[:, out_p:] = o2


# ----------------------------- wrapper ----------------------------------------


def prepare_params(params, *, n_components, n_classes, input_size):
    """One-time fusion + zero-padding of the two sub-networks into lane-dense
    operands.  Hoisted out of the per-call forward so no padded-weight
    construction / HBM traffic happens per call (per perf review)."""
    f32 = jnp.float32
    hidden = params["w1p"].shape[1]
    kc = n_components * n_classes
    split_l2 = (hidden % 128 == 0)

    h2 = 2 * hidden if split_l2 else _round_up(2 * hidden, 128)
    w1 = jnp.zeros((input_size, h2), f32)
    w1 = w1.at[:, :hidden].set(params["w1p"].astype(f32))
    w1 = w1.at[:, hidden:2 * hidden].set(params["w1n"].astype(f32))
    b1 = jnp.zeros((1, h2), f32)
    b1 = b1.at[:, :hidden].set(params["b1p"].astype(f32))
    b1 = b1.at[:, hidden:2 * hidden].set(params["b1n"].astype(f32))

    if split_l2:
        out_p = _round_up(n_components, 128)
        out_n = _round_up(2 * kc, 128)
        out = out_p + out_n
        w2a = jnp.zeros((hidden, out_p), f32).at[:, :n_components].set(params["w2p"].astype(f32))
        w2b = jnp.zeros((hidden, out_n), f32).at[:, :2 * kc].set(params["w2n"].astype(f32))
        b2 = jnp.zeros((1, out), f32)
        b2 = b2.at[:, :n_components].set(params["b2p"].astype(f32))
        b2 = b2.at[:, out_p:out_p + 2 * kc].set(params["b2n"].astype(f32))
        fused = dict(w1=w1, b1=b1, w2a=w2a, w2b=w2b, b2=b2)
        mean_start, sd_start = out_p, out_p + kc
    else:
        raw = n_components + 2 * kc
        out = _round_up(raw, 128)
        w2 = jnp.zeros((h2, out), f32)
        w2 = w2.at[:hidden, :n_components].set(params["w2p"].astype(f32))
        w2 = w2.at[hidden:2 * hidden, n_components:raw].set(params["w2n"].astype(f32))
        b2 = jnp.zeros((1, out), f32)
        b2 = b2.at[:, :n_components].set(params["b2p"].astype(f32))
        b2 = b2.at[:, n_components:raw].set(params["b2n"].astype(f32))
        fused = dict(w1=w1, b1=b1, w2=w2, b2=b2)
        mean_start, sd_start = n_components, n_components + kc

    spec = FusedSpec(input_size=input_size, hidden=hidden,
                     n_components=n_components, n_classes=n_classes,
                     h2=h2, out=out, mean_start=mean_start, sd_start=sd_start,
                     split_l2=split_l2)
    return fused, spec


@functools.partial(jax.jit, static_argnames=("spec",))
def increamental_mixture_forward(x, fused, spec):
    """Returns (pi_logits, mean, sd):
         pi_logits: (B, n_components)
         mean, sd : (B, n_components, n_classes)
       matching OneHotCategorical(logits=pi_logits), Normal(mean, sd).
       `fused, spec` come from prepare_params() (built once, reused per call)."""
    B = x.shape[0]
    kc = spec.n_components * spec.n_classes
    x2 = x.reshape(B, spec.input_size).astype(jnp.float32)   # mirrors x.view(B, input_size)

    tb, bp = _batch_tiling(B)
    if bp != B:
        x2 = jnp.pad(x2, ((0, bp - B), (0, 0)))
    grid = (bp // tb,)

    # Advisory cost estimate for XLA scheduling around the custom call.
    l2_k = spec.hidden if spec.split_l2 else spec.h2
    weight_elems = (spec.input_size * spec.h2 + spec.h2 + l2_k * spec.out + spec.out)
    cost = pl.CostEstimate(
        flops=2 * bp * (spec.input_size * spec.h2 + l2_k * spec.out),
        transcendentals=bp * (spec.h2 + spec.out),
        bytes_accessed=4 * (bp * (spec.input_size + spec.out) + weight_elems),
    )

    x_spec = pl.BlockSpec((tb, spec.input_size), lambda i: (i, 0))
    w1_spec = pl.BlockSpec((spec.input_size, spec.h2), lambda i: (0, 0))
    b1_spec = pl.BlockSpec((1, spec.h2), lambda i: (0, 0))
    b2_spec = pl.BlockSpec((1, spec.out), lambda i: (0, 0))

    if spec.split_l2:
        out_p = spec.mean_start
        kernel = functools.partial(_mdn_kernel_split,
                                   hidden=spec.hidden, out_p=out_p, kc=kc)
        in_specs = [x_spec, w1_spec, b1_spec,
                    pl.BlockSpec((spec.hidden, out_p), lambda i: (0, 0)),
                    pl.BlockSpec((spec.hidden, spec.out - out_p), lambda i: (0, 0)),
                    b2_spec]
        operands = (x2, fused["w1"], fused["b1"], fused["w2a"], fused["w2b"], fused["b2"])
    else:
        kernel = functools.partial(_mdn_kernel_blockdiag, sd_start=spec.sd_start)
        in_specs = [x_spec, w1_spec, b1_spec,
                    pl.BlockSpec((spec.h2, spec.out), lambda i: (0, 0)),
                    b2_spec]
        operands = (x2, fused["w1"], fused["b1"], fused["w2"], fused["b2"])

    out = pl.pallas_call(
        kernel,
        out_shape=jax.ShapeDtypeStruct((bp, spec.out), jnp.float32),
        grid=grid,
        in_specs=in_specs,
        out_specs=pl.BlockSpec((tb, spec.out), lambda i: (i, 0)),
        compiler_params=pltpu.CompilerParams(
            dimension_semantics=("parallel",),          # batch sharded across TCs (v7x)
            vmem_limit_bytes=_vmem_limit_bytes(),
        ),
        cost_estimate=cost,
    )(*operands)

    out = out[:B]
    logits = out[:, :spec.n_components]
    # torch: split(kc)/stack/transpose(0,1) == reshape(B, n_components, n_classes)
    # (element [b, k, c] comes from flat column k*n_classes + c in both).
    mean = out[:, spec.mean_start:spec.mean_start + kc].reshape(B, spec.n_components, spec.n_classes)
    sd = out[:, spec.sd_start:spec.sd_start + kc].reshape(B, spec.n_components, spec.n_classes)
    return logits, mean, sd


# ----------------------------- reference / test --------------------------------


def init_params(key, input_size, n_components, n_classes, hidden_dim=None):
    """Deterministic Linear params. Weights in (in, out) layout, biases as (1, out)."""
    if hidden_dim is None:
        hidden_dim = input_size
    ks = jax.random.split(key, 8)

    def lin(kw, kb, din, dout):
        bound = 1.0 / jnp.sqrt(din)
        w = jax.random.uniform(kw, (din, dout), jnp.float32, -bound, bound)
        b = jax.random.uniform(kb, (1, dout), jnp.float32, -bound, bound)
        return w, b

    w1p, b1p = lin(ks[0], ks[1], input_size, hidden_dim)
    w2p, b2p = lin(ks[2], ks[3], hidden_dim, n_components)
    w1n, b1n = lin(ks[4], ks[5], input_size, hidden_dim)
    w2n, b2n = lin(ks[6], ks[7], hidden_dim, 2 * n_classes * n_components)
    return dict(w1p=w1p, b1p=b1p, w2p=w2p, b2p=b2p,
                w1n=w1n, b1n=b1n, w2n=w2n, b2n=b2n)


def _ref_forward(x, params, n_components, n_classes, input_size):
    """Pure-JAX reference of the same forward (for correctness check)."""
    B = x.shape[0]
    x2 = x.reshape(B, input_size)
    h = _elu(x2 @ params["w1p"] + params["b1p"])
    logits = h @ params["w2p"] + params["b2p"]
    g = _elu(x2 @ params["w1n"] + params["b1n"])
    p = g @ params["w2n"] + params["b2n"]
    kc = n_components * n_classes
    mean = p[:, :kc].reshape(B, n_components, n_classes)
    sd = jnp.exp(p[:, kc:]).reshape(B, n_components, n_classes)
    return logits, mean, sd


if __name__ == "__main__":
    key = jax.random.PRNGKey(0)
    kA_par, kA_x, kB_par, kB_x = jax.random.split(key, 4)

    # --- Config A: module-default sizes (hidden = input_size = 16) -----------
    # exercises the compact block-diagonal layer-2 path.
    B, input_size, n_components, n_classes = 8, 16, 4, 8
    params = init_params(kA_par, input_size, n_components, n_classes)
    fused, spec = prepare_params(params, n_components=n_components,
                                 n_classes=n_classes, input_size=input_size)
    x = jax.random.normal(kA_x, (B, input_size), jnp.float32)

    logits, mean, sd = increamental_mixture_forward(x, fused, spec)
    jax.block_until_ready((logits, mean, sd))
    assert logits.shape == (B, n_components)
    assert mean.shape == (B, n_components, n_classes)
    assert sd.shape == (B, n_components, n_classes)
    assert bool(jnp.all(sd > 0))  # sd = exp(raw) must be positive
    rl, rm, rs = _ref_forward(x, params, n_components, n_classes, input_size)
    assert bool(jnp.allclose(logits, rl, atol=1e-4, rtol=1e-4))
    assert bool(jnp.allclose(mean, rm, atol=1e-4, rtol=1e-4))
    assert bool(jnp.allclose(sd, rs, atol=1e-4, rtol=1e-4))

    # --- Config B: 128-aligned hidden + multi-step grid ----------------------
    # exercises the split layer-2 path and the even-grid batch tiling.
    B2, input_size2, n_components2, n_classes2 = 272, 128, 3, 5
    params2 = init_params(kB_par, input_size2, n_components2, n_classes2)
    fused2, spec2 = prepare_params(params2, n_components=n_components2,
                                   n_classes=n_classes2, input_size=input_size2)
    xb = jax.random.normal(kB_x, (B2, input_size2), jnp.float32)

    l2, m2, s2 = increamental_mixture_forward(xb, fused2, spec2)
    jax.block_until_ready((l2, m2, s2))
    assert l2.shape == (B2, n_components2)
    assert m2.shape == (B2, n_components2, n_classes2)
    assert s2.shape == (B2, n_components2, n_classes2)
    rl2, rm2, rs2 = _ref_forward(xb, params2, n_components2, n_classes2, input_size2)
    assert bool(jnp.allclose(l2, rl2, atol=2e-3, rtol=2e-3))
    assert bool(jnp.allclose(m2, rm2, atol=2e-3, rtol=2e-3))
    assert bool(jnp.allclose(s2, rs2, atol=2e-3, rtol=2e-3))

    print("KERNEL_OK")
</pallas_src>

<mosaic_0001>
module attributes {stable_mosaic.version = 11 : i64} {
  func.func @_mdn_kernel_blockdiag(%arg0: i32, %arg1: memref<8x16xf32, #tpu.memory_space<vmem>>, %arg2: memref<16x128xf32, #tpu.memory_space<vmem>>, %arg3: memref<1x128xf32, #tpu.memory_space<vmem>>, %arg4: memref<128x128xf32, #tpu.memory_space<vmem>>, %arg5: memref<1x128xf32, #tpu.memory_space<vmem>>, %arg6: memref<8x128xf32, #tpu.memory_space<vmem>>) attributes {dimension_semantics = [#tpu.dimension_semantics<parallel>], iteration_bounds = array<i64: 1>, scalar_prefetch = 0 : i64, scratch_operands = 0 : i64, tpu.core_type = #tpu.core_type<tc>, window_params = [{transform_indices = @transform_0, window_bounds = array<i64: 8, 16>}, {pipeline_mode = #tpu.pipeline_mode<synchronous>, transform_indices = @transform_1, window_bounds = array<i64: 16, 128>}, {pipeline_mode = #tpu.pipeline_mode<synchronous>, transform_indices = @transform_2, window_bounds = array<i64: 1, 128>}, {pipeline_mode = #tpu.pipeline_mode<synchronous>, transform_indices = @transform_3, window_bounds = array<i64: 128, 128>}, {pipeline_mode = #tpu.pipeline_mode<synchronous>, transform_indices = @transform_4, window_bounds = array<i64: 1, 128>}, {transform_indices = @transform_5, window_bounds = array<i64: 8, 128>}]} {
    %c0 = arith.constant 0 : index
    %c0_0 = arith.constant 0 : index
    %0 = vector.load %arg1[%c0, %c0_0] : memref<8x16xf32, #tpu.memory_space<vmem>>, vector<8x16xf32>
    %c0_1 = arith.constant 0 : index
    %c0_2 = arith.constant 0 : index
    %1 = vector.load %arg2[%c0_1, %c0_2] : memref<16x128xf32, #tpu.memory_space<vmem>>, vector<16x128xf32>
    %cst = arith.constant dense<0.000000e+00> : vector<8x128xf32>
    %2 = tpu.matmul %0, %1, %cst {dimension_numbers = #tpu.dot_dimension_numbers<[1], [0], [0], [1], [0, 0, 1, 1], [], []>} : vector<8x16xf32>, vector<16x128xf32>, vector<8x128xf32> -> vector<8x128xf32>
    %c0_3 = arith.constant 0 : index
    %c0_4 = arith.constant 0 : index
    %3 = vector.load %arg3[%c0_3, %c0_4] : memref<1x128xf32, #tpu.memory_space<vmem>>, vector<1x128xf32>
    %4 = vector.broadcast %3 : vector<1x128xf32> to vector<8x128xf32>
    %5 = arith.addf %2, %4 : vector<8x128xf32>
    %cst_5 = arith.constant 0.000000e+00 : f32
    %6 = vector.broadcast %cst_5 : f32 to vector<8x128xf32>
    %7 = arith.cmpf ogt, %5, %6 : vector<8x128xf32>
    %cst_6 = arith.constant 0.000000e+00 : f32
    %8 = vector.broadcast %cst_6 : f32 to vector<8x128xf32>
    %9 = arith.minimumf %5, %8 : vector<8x128xf32>
    %10 = math.exp %9 : vector<8x128xf32>
    %cst_7 = arith.constant 1.000000e+00 : f32
    %11 = vector.broadcast %cst_7 : f32 to vector<8x128xf32>
    %12 = arith.subf %10, %11 : vector<8x128xf32>
    %13 = arith.select %7, %5, %12 : vector<8x128xi1>, vector<8x128xf32>
    %c0_8 = arith.constant 0 : index
    %c0_9 = arith.constant 0 : index
    %14 = vector.load %arg4[%c0_8, %c0_9] : memref<128x128xf32, #tpu.memory_space<vmem>>, vector<128x128xf32>
    %cst_10 = arith.constant dense<0.000000e+00> : vector<8x128xf32>
    %15 = tpu.matmul %13, %14, %cst_10 {dimension_numbers = #tpu.dot_dimension_numbers<[1], [0], [0], [1], [0, 0, 1, 1], [], []>} : vector<8x128xf32>, vector<128x128xf32>, vector<8x128xf32> -> vector<8x128xf32>
    %c0_11 = arith.constant 0 : index
    %c0_12 = arith.constant 0 : index
    %16 = vector.load %arg5[%c0_11, %c0_12] : memref<1x128xf32, #tpu.memory_space<vmem>>, vector<1x128xf32>
    %17 = vector.broadcast %16 : vector<1x128xf32> to vector<8x128xf32>
    %18 = arith.addf %15, %17 : vector<8x128xf32>
    %19 = tpu.iota {dimensions = array<i32: 1>} : vector<8x128xi32>
    %c36_i32 = arith.constant 36 : i32
    %20 = vector.broadcast %c36_i32 : i32 to vector<8x128xi32>
    %21 = arith.cmpi sge, %19, %20 : vector<8x128xi32>
    %22 = math.exp %18 : vector<8x128xf32>
    %23 = arith.select %21, %22, %18 : vector<8x128xi1>, vector<8x128xf32>
    %c0_13 = arith.constant 0 : index
    %c0_14 = arith.constant 0 : index
    %24 = vector.load %arg6[%c0_13, %c0_14] : memref<8x128xf32, #tpu.memory_space<vmem>>, vector<8x128xf32>
    tpu.vector_store %arg6[%c0_13, %c0_14], %23 {strides = array<i32>} : memref<8x128xf32, #tpu.memory_space<vmem>>, vector<8x128xf32>,
    return
  }
  func.func @transform_0(%arg0: i32) -> (i32, i32) {
    %c0_i32 = arith.constant 0 : i32
    %c0_i32_0 = arith.constant 0 : i32
    return %arg0, %c0_i32 : i32, i32
  }
  func.func @transform_1(%arg0: i32) -> (i32, i32) {
    %c0_i32 = arith.constant 0 : i32
    %c0_i32_0 = arith.constant 0 : i32
    %c0_i32_1 = arith.constant 0 : i32
    return %c0_i32, %c0_i32_0 : i32, i32
  }
  func.func @transform_2(%arg0: i32) -> (i32, i32) {
    %c0_i32 = arith.constant 0 : i32
    %c0_i32_0 = arith.constant 0 : i32
    %c0_i32_1 = arith.constant 0 : i32
    return %c0_i32, %c0_i32_0 : i32, i32
  }
  func.func @transform_3(%arg0: i32) -> (i32, i32) {
    %c0_i32 = arith.constant 0 : i32
    %c0_i32_0 = arith.constant 0 : i32
    %c0_i32_1 = arith.constant 0 : i32
    return %c0_i32, %c0_i32_0 : i32, i32
  }
  func.func @transform_4(%arg0: i32) -> (i32, i32) {
    %c0_i32 = arith.constant 0 : i32
    %c0_i32_0 = arith.constant 0 : i32
    %c0_i32_1 = arith.constant 0 : i32
    return %c0_i32, %c0_i32_0 : i32, i32
  }
  func.func @transform_5(%arg0: i32) -> (i32, i32) {
    %c0_i32 = arith.constant 0 : i32
    %c0_i32_0 = arith.constant 0 : i32
    return %arg0, %c0_i32 : i32, i32
  }
}

</mosaic_0001>

<llo_original>
// kernel: increamental_mixture_forward.1
$region0: #{increamental_mixture_forward.1}
  #allocation0 [shape = 'u32[]', space=smem, size = 0x4, offset = 0x4, fixed_abs, tag = 'smem constant byte address 0x4 - core index']
  #allocation1 [shape = 'u32[72,128]{1,0:T(1,128)}', space=vmem, size = 0x9000, scoped, tag = 'internal scratch']
  %s0 = inlined_call_operand.hbm [shape: f32[8,16], index: 0, kind: input, shape index: {}]
  %s1 = inlined_call_operand.hbm [shape: f32[16,128], index: 1, kind: input, shape index: {}]
  %s2 = inlined_call_operand.hbm [shape: f32[1,128], index: 2, kind: input, shape index: {}]
  %s3 = inlined_call_operand.hbm [shape: f32[128,128], index: 3, kind: input, shape index: {}]
  %s4 = inlined_call_operand.vmem [shape: f32[1,128], index: 4, kind: input, shape index: {}]
  %s5 = inlined_call_operand.vmem [shape: f32[8,128], index: 5, kind: output, shape index: {}]
  %s6 = sld [smem:[#allocation0]]
  $region46: #{increamental_mixture_forward.1} parent=0
    _
  %s8 = ssub.s32 1, %s6
  %s9 = scalar_select 0, %s8, %s6
  $region1: #{increamental_mixture_forward.1} parent=0
    #allocation2 [shape = 'u8[4096]{0}', space=vmem, size = 0x1000, scoped, tag = 'input window, operand 0, single buffered']
    #allocation3 [shape = 's32[1]{0}', space=sflag, size = 0x4, scoped, tag = 'scoped memory for increamental_mixture_forward.1']
    #allocation4 [shape = 'u8[8192]{0}', space=vmem, size = 0x2000, scoped, tag = 'input window, operand 1, single buffered']
    #allocation5 [shape = 's32[1]{0}', space=sflag, size = 0x4, scoped, tag = 'scoped memory for increamental_mixture_forward.1']
    #allocation6 [shape = 'u8[512]{0}', space=vmem, size = 0x400, scoped, tag = 'input window, operand 2, single buffered']
    #allocation7 [shape = 'u8[65536]{0}', space=vmem, size = 0x10000, scoped, tag = 'input window, operand 3, single buffered']
    #allocation8 [shape = 's32[1]{0}', space=sflag, size = 0x4, scoped, tag = 'scoped memory for increamental_mixture_forward.1']
    %10 = vsyncpa [#allocation3], 0
    %11 = vsyncpa [#allocation5], 0
    %12 = vsyncpa [#allocation8], 0
    // Predicated region
    $region2: #{increamental_mixture_forward.1} parent=1 // pred_check
      _
    $region3: #{increamental_mixture_forward.1} parent=1 // pred_check_branch
      %14 = sbr.rel (0) target = $region5
    $region4: #{increamental_mixture_forward.1} parent=1 // pred_region
      %16 = vsyncadd [#allocation3], 0
      %s18 = sshll.u32 %s0, 4
      %s19 = int_to_ptr.hbm [resolvable:$true] %s18
      %s20 = sshll.u32 [#allocation2], 4
      %s21 = int_to_ptr.vmem [resolvable:$true] %s20
      %23 = dma.hbm_to_vmem [thread:$0]  %s19, 128, %s21, [#allocation3]
    $region5: #{increamental_mixture_forward.1} parent=1 // pred_fallthru
      _
    // Predicated region
    $region6: #{increamental_mixture_forward.1} parent=1 // pred_check
      _
    $region7: #{increamental_mixture_forward.1} parent=1 // pred_check_branch
      %25 = sbr.rel (0) target = $region9
    $region8: #{increamental_mixture_forward.1} parent=1 // pred_region
      %27 = vsyncadd [#allocation5], 0
      %s28 = sshll.u32 %s1, 4
      %s29 = int_to_ptr.hbm [resolvable:$true] %s28
      %s30 = sshll.u32 [#allocation4], 4
      %s31 = int_to_ptr.vmem [resolvable:$true] %s30
      %36 = dma.hbm_to_vmem [thread:$0]  %s29, 256, %s31, [#allocation5], 128, 128, 8
    $region9: #{increamental_mixture_forward.1} parent=1 // pred_fallthru
      _
    // Predicated region
    $region10: #{increamental_mixture_forward.1} parent=1 // pred_check
      _
    $region11: #{increamental_mixture_forward.1} parent=1 // pred_check_branch
      %38 = sbr.rel (0) target = $region13
    $region12: #{increamental_mixture_forward.1} parent=1 // pred_region
      %40 = vsyncadd [#allocation5], 0
      %s42 = sshll.u32 %s2, 4
      %s43 = int_to_ptr.hbm [resolvable:$true] %s42
      %s44 = sshll.u32 [#allocation6], 4
      %s45 = int_to_ptr.vmem [resolvable:$true] %s44
      %47 = dma.hbm_to_vmem [thread:$0]  %s43, 16, %s45, [#allocation5]
    $region13: #{increamental_mixture_forward.1} parent=1 // pred_fallthru
      _
    // Predicated region
    $region14: #{increamental_mixture_forward.1} parent=1 // pred_check
      _
    $region15: #{increamental_mixture_forward.1} parent=1 // pred_check_branch
      %49 = sbr.rel (0) target = $region17
    $region16: #{increamental_mixture_forward.1} parent=1 // pred_region
      %51 = vsyncadd [#allocation8], 0
      %s52 = sshll.u32 %s3, 4
      %s53 = int_to_ptr.hbm [resolvable:$true] %s52
      %s54 = sshll.u32 [#allocation7], 4
      %s55 = int_to_ptr.vmem [resolvable:$true] %s54
      %60 = dma.hbm_to_vmem [thread:$0]  %s53, 2048, %s55, [#allocation8], 128, 128, 8
    $region17: #{increamental_mixture_forward.1} parent=1 // pred_fallthru
      _
    // Predicated region
    $region18: #{increamental_mixture_forward.1} parent=1 // pred_check
      _
    $region19: #{increamental_mixture_forward.1} parent=1 // pred_check_branch
      %62 = sbr.rel (0) target = $region21
    $region20: #{increamental_mixture_forward.1} parent=1 // pred_region
      _
    $region21: #{increamental_mixture_forward.1} parent=1 // pred_fallthru
      _
    // Predicated region
    $region22: #{increamental_mixture_forward.1} parent=1 // pred_check
      _
    $region23: #{increamental_mixture_forward.1} parent=1 // pred_check_branch
      %64 = sbr.rel (0) target = $region25
    $region24: #{increamental_mixture_forward.1} parent=1 // pred_region
      %66 = dma.done [#allocation3], 128
    $region25: #{increamental_mixture_forward.1} parent=1 // pred_fallthru
      _
    // Predicated region
    $region26: #{increamental_mixture_forward.1} parent=1 // pred_check
      _
    $region27: #{increamental_mixture_forward.1} parent=1 // pred_check_branch
      %68 = sbr.rel (0) target = $region29
    $region28: #{increamental_mixture_forward.1} parent=1 // pred_region
      %70 = dma.done [#allocation5], 256
    $region29: #{increamental_mixture_forward.1} parent=1 // pred_fallthru
      _
    // Predicated region
    $region30: #{increamental_mixture_forward.1} parent=1 // pred_check
      _
    $region31: #{increamental_mixture_forward.1} parent=1 // pred_check_branch
      %72 = sbr.rel (0) target = $region33
    $region32: #{increamental_mixture_forward.1} parent=1 // pred_region
      %74 = dma.done [#allocation5], 16
    $region33: #{increamental_mixture_forward.1} parent=1 // pred_fallthru
      _
    // Predicated region
    $region34: #{increamental_mixture_forward.1} parent=1 // pred_check
      _
    $region35: #{increamental_mixture_forward.1} parent=1 // pred_check_branch
      %76 = sbr.rel (0) target = $region37
    $region36: #{increamental_mixture_forward.1} parent=1 // pred_region
      %78 = dma.done [#allocation8], 2048
    $region37: #{increamental_mixture_forward.1} parent=1 // pred_fallthru
      _
    %v79 = vld [vmem:[#allocation2] sm:$0xff]
    %v80 = vld [vmem:[#allocation4] sm:$0xff]
    %v81 = vld [vmem:[#allocation4 + $0x8] sm:$0xff]
    %v82 = vld [vmem:[#allocation6] sm:$0x1]
    %v84 = vperm.slane %v82, 0
    %vm86 = vcmask 130048
    %v88 = vsel %vm86, %v79, 0
    %90 = vmatpush.msra.mxu0 0.0
    %91 = vmatpush.msra.mxu0 0.0
    %92 = vmatpush.msra.mxu0 0.0
    %93 = vmatpush.msra.mxu0 0.0
    %94 = vmatpush.msra.mxu0 0.0
    %95 = vmatpush.msra.mxu0 0.0
    %96 = vmatpush.msra.mxu0 0.0
    %97 = vmatpush.msra.mxu0 0.0
    %98 = vmatpush.msra.mxu0 0.0
    %99 = vmatpush.msra.mxu0 0.0
    %100 = vmatpush.msra.mxu0 0.0
    %101 = vmatpush.msra.mxu0 0.0
    %102 = vmatpush.msra.mxu0 0.0
    %103 = vmatpush.msra.mxu0 0.0
    %104 = vmatpush.msra.mxu0 %v81
    %105 = vmatpush.msra.mxu0 %v80
    %106 = vmatmul.f32.gmra.mxu0 %v88
    %v107 = vpop.f32.mrf.mxu0
    %v108 = vadd.f32 %v84, %v107
    %109 = vdwg.mxu0
    %vm110 = vcmp.gt.f32.partialorder %v108, 0.0
    %v111 = vmin.f32 %v108, 0.0
    %v112 = vmul.f32 %v111, 1.442695
    %v113 = vpow.pop %v112
    %v114 = vsub.f32 %v113, 1.0
    %v115 = vsel %vm110, %v108, %v114
    %v116 = vld [vmem:[#allocation7] sm:$0xff]
    %v117 = vld [vmem:[#allocation7 + $0x8] sm:$0xff]
    %v118 = vld [vmem:[#allocation7 + $0x10] sm:$0xff]
    %v119 = vld [vmem:[#allocation7 + $0x18] sm:$0xff]
    %v120 = vld [vmem:[#allocation7 + $0x20] sm:$0xff]
    %v121 = vld [vmem:[#allocation7 + $0x28] sm:$0xff]
    %v122 = vld [vmem:[#allocation7 + $0x30] sm:$0xff]
    %v123 = vld [vmem:[#allocation7 + $0x38] sm:$0xff]
    %v124 = vld [vmem:[#allocation7 + $0x40] sm:$0xff]
    %v125 = vld [vmem:[#allocation7 + $0x48] sm:$0xff]
    %v126 = vld [vmem:[#allocation7 + $0x50] sm:$0xff]
    %v127 = vld [vmem:[#allocation7 + $0x58] sm:$0xff]
    %v128 = vld [vmem:[#allocation7 + $0x60] sm:$0xff]
    %v129 = vld [vmem:[#allocation7 + $0x68] sm:$0xff]
    %v130 = vld [vmem:[#allocation7 + $0x70] sm:$0xff]
    %v131 = vld [vmem:[#allocation7 + $0x78] sm:$0xff]
    %v132 = vld [vmem:[%s4] sm:$0x1]
    %v134 = vperm.slane %v132, 0
    %136 = vmatpush.msra.mxu0 %v131
    %137 = vmatpush.msra.mxu0 %v130
    %138 = vmatpush.msra.mxu0 %v129
    %139 = vmatpush.msra.mxu0 %v128
    %140 = vmatpush.msra.mxu0 %v127
    %141 = vmatpush.msra.mxu0 %v126
    %142 = vmatpush.msra.mxu0 %v125
    %143 = vmatpush.msra.mxu0 %v124
    %144 = vmatpush.msra.mxu0 %v123
    %145 = vmatpush.msra.mxu0 %v122
    %146 = vmatpush.msra.mxu0 %v121
    %147 = vmatpush.msra.mxu0 %v120
    %148 = vmatpush.msra.mxu0 %v119
    %149 = vmatpush.msra.mxu0 %v118
    %150 = vmatpush.msra.mxu0 %v117
    %151 = vmatpush.msra.mxu0 %v116
    %152 = vmatmul.f32.gmra.mxu0 %v115
    %v153 = vpop.f32.mrf.mxu0
    %v154 = vadd.f32 %v134, %v153
    %155 = vdwg.mxu0
    %v156 = vlaneseq
    %v157 = vand.u32 %v156, 127
    %vm158 = vcmp.ge.s32.totalorder %v157, 36
    %v159 = vmul.f32 %v154, 1.442695
    %v160 = vpow.pop %v159
    %v161 = vsel %vm158, %v160, %v154
    %162 = vst [vmem:[%s5] sm:$0xff] %v161
    // Predicated region
    $region38: #{increamental_mixture_forward.1} parent=1 // pred_check
      _
    $region39: #{increamental_mixture_forward.1} parent=1 // pred_check_branch
      %164 = sbr.rel (0) target = $region41
    $region40: #{increamental_mixture_forward.1} parent=1 // pred_region
      _
    $region41: #{increamental_mixture_forward.1} parent=1 // pred_fallthru
      _
    // Predicated region
    $region42: #{increamental_mixture_forward.1} parent=1 // pred_check
      _
    $region43: #{increamental_mixture_forward.1} parent=1 // pred_check_branch
      %166 = sbr.rel (0) target = $region45
    $region44: #{increamental_mixture_forward.1} parent=1 // pred_region
      _
    $region45: #{increamental_mixture_forward.1} parent=1 // pred_fallthru
      _
    %167 = vsyncpa [#allocation3], 1
    %168 = vsyncpa [#allocation5], 1
    %169 = vsyncpa [#allocation8], 1

</llo_original>
